<compile_context>
chip_gen: v5e
topology: v5e:2x2
jax: 0.10.0
libtpu: 0.0.40
codegen_flags: <defaults>
</compile_context>

<pallas_src>
import jax
import jax.numpy as jnp
from jax.experimental import pallas as pl
from jax.experimental.pallas import tpu as pltpu

OUT_CHANNELS = 64            # fixed by the module
FUSED = 2 * OUT_CHANNELS     # mu | logstd fused along lanes -> 128 (lane-dense)


def _round_up(x, m):
    return ((x + m - 1) // m) * m


def _gcn_fused_kernel(a_ref, xw_ref, dis_ref, b_ref, out_ref, acc_ref):
    """One (T, T) block of 0/1 A times a (T, 128) block of the pre-scaled XW.

    a_ref:   (T, T)   bf16  raw adjacency (+ self-loops) block
    xw_ref:  (T, 128) bf16  (X @ [W_mu|W_logstd]) * d^{-1/2}   (column-side scaling)
    dis_ref: (T, 1)   f32   d^{-1/2} for the output rows        (row-side scaling)
    b_ref:   (1, 128) f32   fused bias
    out_ref: (T, 128) f32
    acc_ref: (T, 128) f32   scratch accumulator (lives across the k axis)
    """
    k = pl.program_id(1)

    @pl.when(k == 0)
    def _():
        acc_ref[...] = jnp.zeros_like(acc_ref)

    acc_ref[...] += jnp.dot(a_ref[...], xw_ref[...],
                            preferred_element_type=jnp.float32)

    @pl.when(k == pl.num_programs(1) - 1)
    def _():
        out_ref[...] = acc_ref[...] * dis_ref[...] + b_ref[...]


def variational_linear_encoder(x, edge_index, params):
    """Forward of VariationalLinearEncoder: returns (mu, logstd), each (N, 64)."""
    N, _ = x.shape
    src, dst = edge_index[0], edge_index[1]

    # Glue (plain JAX): dense 0/1 adjacency, messages flow src -> dst, plus self-loops.
    # TODO(synk): for large sparse graphs use a scalar-prefetch gather kernel (O(E*128))
    # instead of materializing the dense N x N adjacency.
    a = jnp.zeros((N, N), jnp.float32).at[dst, src].set(1.0)
    a = jnp.maximum(a, jnp.eye(N, dtype=jnp.float32))

    deg = jnp.sum(a, axis=1, keepdims=True)                       # (N, 1)
    dis = jnp.where(deg > 0.0, jax.lax.rsqrt(deg), 0.0)           # d^{-1/2}

    # Fused heads -> one lane-dense 128-wide output.
    w = jnp.concatenate([params["w_mu"], params["w_logstd"]], axis=1)   # (F, 128)
    b = jnp.concatenate([params["b_mu"], params["b_logstd"]], axis=1)   # (1, 128)

    # X @ W is tiny (K = F): do it once here, then apply the column-side scaling.
    xw = jnp.dot(x.astype(jnp.float32), w) * dis                  # (N, 128) f32

    # Tile size / padding so block shapes satisfy the (8, 128) rule and divide the grid.
    t = min(512, _round_up(N, 8))
    n_pad = _round_up(N, t)

    a_p = jnp.pad(a, ((0, n_pad - N), (0, n_pad - N))).astype(jnp.bfloat16)   # 0/1 exact
    xw_p = jnp.pad(xw, ((0, n_pad - N), (0, 0))).astype(jnp.bfloat16)
    dis_p = jnp.pad(dis, ((0, n_pad - N), (0, 0)))

    grid = (n_pad // t, n_pad // t)   # (row tiles [parallel], k tiles [arbitrary])

    out = pl.pallas_call(
        _gcn_fused_kernel,
        out_shape=jax.ShapeDtypeStruct((n_pad, FUSED), jnp.float32),
        grid_spec=pltpu.PrefetchScalarGridSpec(
            num_scalar_prefetch=0,
            grid=grid,
            in_specs=[
                pl.BlockSpec((t, t), lambda i, k: (i, k)),         # A block
                pl.BlockSpec((t, FUSED), lambda i, k: (k, 0)),     # scaled XW block
                pl.BlockSpec((t, 1), lambda i, k: (i, 0)),         # row-side d^{-1/2}
                pl.BlockSpec((1, FUSED), lambda i, k: (0, 0)),     # fused bias
            ],
            out_specs=pl.BlockSpec((t, FUSED), lambda i, k: (i, 0)),
            scratch_shapes=[pltpu.VMEM((t, FUSED), jnp.float32)],
        ),
        compiler_params=pltpu.CompilerParams(
            dimension_semantics=("parallel", "arbitrary"),
        ),
    )(a_p, xw_p, dis_p, b)

    out = out[:N]
    return out[:, :OUT_CHANNELS], out[:, OUT_CHANNELS:]


def init_params(key, in_channels, out_channels=OUT_CHANNELS):
    """Deterministic GCNConv-style init: glorot-uniform weights, zero bias."""
    k1, k2 = jax.random.split(key)
    limit = jnp.sqrt(6.0 / (in_channels + out_channels))
    return {
        "w_mu": jax.random.uniform(k1, (in_channels, out_channels),
                                   jnp.float32, -limit, limit),
        "b_mu": jnp.zeros((1, out_channels), jnp.float32),
        "w_logstd": jax.random.uniform(k2, (in_channels, out_channels),
                                       jnp.float32, -limit, limit),
        "b_logstd": jnp.zeros((1, out_channels), jnp.float32),
    }


def _reference(x, edge_index, params):
    """Pure-JAX f32 reference of the same GCN forward (for the correctness check)."""
    N = x.shape[0]
    a = jnp.zeros((N, N), jnp.float32).at[edge_index[1], edge_index[0]].set(1.0)
    a = jnp.maximum(a, jnp.eye(N, dtype=jnp.float32))
    deg = a.sum(axis=1, keepdims=True)
    dis = jnp.where(deg > 0, 1.0 / jnp.sqrt(deg), 0.0)
    a_norm = dis * a * dis.T
    mu = a_norm @ (x @ params["w_mu"]) + params["b_mu"]
    ls = a_norm @ (x @ params["w_logstd"]) + params["b_logstd"]
    return mu, ls


if __name__ == "__main__":
    key = jax.random.PRNGKey(0)
    k_x, k_p = jax.random.split(key)

    N = 8            # number of nodes
    F = 4            # cfg.TASK_SPECIFIC.GEOMETRIC.num_features

    x = jax.random.normal(k_x, (N, F), dtype=jnp.float32)
    # Undirected ring graph (both directions), no pre-existing self-loops.
    src = jnp.arange(N, dtype=jnp.int32)
    dst = (src + 1) % N
    edge_index = jnp.stack([jnp.concatenate([src, dst]),
                            jnp.concatenate([dst, src])], axis=0)  # (2, 2N)

    params = init_params(k_p, F)

    mu, logstd = variational_linear_encoder(x, edge_index, params)
    jax.block_until_ready((mu, logstd))

    ref_mu, ref_ls = _reference(x, edge_index, params)
    assert mu.shape == (N, OUT_CHANNELS) and logstd.shape == (N, OUT_CHANNELS)
    # bf16 MXU feeds (f32 accumulation) -> loosened tolerances vs the f32 reference.
    assert jnp.allclose(mu, ref_mu, atol=2e-2, rtol=2e-2)
    assert jnp.allclose(logstd, ref_ls, atol=2e-2, rtol=2e-2)

    print("KERNEL_OK")
</pallas_src>

<mosaic_0001>
module attributes {stable_mosaic.version = 11 : i64} {
  func.func @_gcn_fused_kernel(%arg0: i32, %arg1: i32, %arg2: memref<8x8xbf16, #tpu.memory_space<vmem>>, %arg3: memref<8x128xbf16, #tpu.memory_space<vmem>>, %arg4: memref<8x1xf32, #tpu.memory_space<vmem>>, %arg5: memref<1x128xf32, #tpu.memory_space<vmem>>, %arg6: memref<8x128xf32, #tpu.memory_space<vmem>>, %arg7: memref<8x128xf32, #tpu.memory_space<vmem>>) attributes {dimension_semantics = [#tpu.dimension_semantics<parallel>, #tpu.dimension_semantics<arbitrary>], iteration_bounds = array<i64: 1, 1>, scalar_prefetch = 0 : i64, scratch_operands = 1 : i64, tpu.core_type = #tpu.core_type<tc>, window_params = [{transform_indices = @transform_0, window_bounds = array<i64: 8, 8>}, {transform_indices = @transform_1, window_bounds = array<i64: 8, 128>}, {transform_indices = @transform_2, window_bounds = array<i64: 8, 1>}, {pipeline_mode = #tpu.pipeline_mode<synchronous>, transform_indices = @transform_3, window_bounds = array<i64: 1, 128>}, {transform_indices = @transform_4, window_bounds = array<i64: 8, 128>}]} {
    %c0_i32 = arith.constant 0 : i32
    %0 = arith.cmpi eq, %arg1, %c0_i32 : i32
    %1 = arith.extui %0 : i1 to i32
    %c0_i32_0 = arith.constant 0 : i32
    %2 = arith.cmpi ne, %1, %c0_i32_0 : i32
    scf.if %2 {
      %cst_10 = arith.constant 0.000000e+00 : f32
      %12 = vector.broadcast %cst_10 : f32 to vector<8x128xf32>
      %c0_11 = arith.constant 0 : index
      %c0_12 = arith.constant 0 : index
      %13 = vector.load %arg7[%c0_11, %c0_12] : memref<8x128xf32, #tpu.memory_space<vmem>>, vector<8x128xf32>
      tpu.vector_store %arg7[%c0_11, %c0_12], %12 {strides = array<i32>} : memref<8x128xf32, #tpu.memory_space<vmem>>, vector<8x128xf32>,
    } else {
    }
    %c0 = arith.constant 0 : index
    %c0_1 = arith.constant 0 : index
    %3 = vector.load %arg7[%c0, %c0_1] : memref<8x128xf32, #tpu.memory_space<vmem>>, vector<8x128xf32>
    %c0_2 = arith.constant 0 : index
    %c0_3 = arith.constant 0 : index
    %4 = vector.load %arg2[%c0_2, %c0_3] : memref<8x8xbf16, #tpu.memory_space<vmem>>, vector<8x8xbf16>
    %c0_4 = arith.constant 0 : index
    %c0_5 = arith.constant 0 : index
    %5 = vector.load %arg3[%c0_4, %c0_5] : memref<8x128xbf16, #tpu.memory_space<vmem>>, vector<8x128xbf16>
    %cst = arith.constant dense<0.000000e+00> : vector<8x128xf32>
    %6 = tpu.matmul %4, %5, %cst {dimension_numbers = #tpu.dot_dimension_numbers<[1], [0], [0], [1], [0, 0, 1, 1], [], []>} : vector<8x8xbf16>, vector<8x128xbf16>, vector<8x128xf32> -> vector<8x128xf32>
    %7 = arith.addf %3, %6 : vector<8x128xf32>
    %c0_6 = arith.constant 0 : index
    %c0_7 = arith.constant 0 : index
    %8 = vector.load %arg7[%c0_6, %c0_7] : memref<8x128xf32, #tpu.memory_space<vmem>>, vector<8x128xf32>
    tpu.vector_store %arg7[%c0_6, %c0_7], %7 {strides = array<i32>} : memref<8x128xf32, #tpu.memory_space<vmem>>, vector<8x128xf32>,
    %c0_i32_8 = arith.constant 0 : i32
    %9 = arith.cmpi eq, %arg1, %c0_i32_8 : i32
    %10 = arith.extui %9 : i1 to i32
    %c0_i32_9 = arith.constant 0 : i32
    %11 = arith.cmpi ne, %10, %c0_i32_9 : i32
    scf.if %11 {
      %c0_10 = arith.constant 0 : index
      %c0_11 = arith.constant 0 : index
      %12 = vector.load %arg7[%c0_10, %c0_11] : memref<8x128xf32, #tpu.memory_space<vmem>>, vector<8x128xf32>
      %c0_12 = arith.constant 0 : index
      %c0_13 = arith.constant 0 : index
      %13 = vector.load %arg4[%c0_12, %c0_13] : memref<8x1xf32, #tpu.memory_space<vmem>>, vector<8x1xf32>
      %14 = vector.broadcast %13 : vector<8x1xf32> to vector<8x128xf32>
      %15 = arith.mulf %12, %14 : vector<8x128xf32>
      %c0_14 = arith.constant 0 : index
      %c0_15 = arith.constant 0 : index
      %16 = vector.load %arg5[%c0_14, %c0_15] : memref<1x128xf32, #tpu.memory_space<vmem>>, vector<1x128xf32>
      %17 = vector.broadcast %16 : vector<1x128xf32> to vector<8x128xf32>
      %18 = arith.addf %15, %17 : vector<8x128xf32>
      %c0_16 = arith.constant 0 : index
      %c0_17 = arith.constant 0 : index
      %19 = vector.load %arg6[%c0_16, %c0_17] : memref<8x128xf32, #tpu.memory_space<vmem>>, vector<8x128xf32>
      tpu.vector_store %arg6[%c0_16, %c0_17], %18 {strides = array<i32>} : memref<8x128xf32, #tpu.memory_space<vmem>>, vector<8x128xf32>,
    } else {
    }
    return
  }
  func.func @transform_0(%arg0: i32, %arg1: i32) -> (i32, i32) {
    %c0_i32 = arith.constant 0 : i32
    return %arg0, %arg1 : i32, i32
  }
  func.func @transform_1(%arg0: i32, %arg1: i32) -> (i32, i32) {
    %c0_i32 = arith.constant 0 : i32
    %c0_i32_0 = arith.constant 0 : i32
    return %arg1, %c0_i32 : i32, i32
  }
  func.func @transform_2(%arg0: i32, %arg1: i32) -> (i32, i32) {
    %c0_i32 = arith.constant 0 : i32
    %c0_i32_0 = arith.constant 0 : i32
    return %arg0, %c0_i32 : i32, i32
  }
  func.func @transform_3(%arg0: i32, %arg1: i32) -> (i32, i32) {
    %c0_i32 = arith.constant 0 : i32
    %c0_i32_0 = arith.constant 0 : i32
    %c0_i32_1 = arith.constant 0 : i32
    return %c0_i32, %c0_i32_0 : i32, i32
  }
  func.func @transform_4(%arg0: i32, %arg1: i32) -> (i32, i32) {
    %c0_i32 = arith.constant 0 : i32
    %c0_i32_0 = arith.constant 0 : i32
    return %arg0, %c0_i32 : i32, i32
  }
}

</mosaic_0001>

<llo_original>
// kernel: tpu_custom_call.1
$region0: #{tpu_custom_call.1}
  #allocation0 [shape = 'u32[]', space=smem, size = 0x4, offset = 0x4, fixed_abs, tag = 'smem constant byte address 0x4 - core index']
  #allocation1 [shape = 'u32[72,128]{1,0:T(1,128)}', space=vmem, size = 0x9000, scoped, tag = 'internal scratch']
  #allocation2 [shape = 'f32[8,128]{1,0:T(8,128)}', space=vmem, size = 0x1000, scoped, tag = 'scratch operand']
  %s0 = inlined_call_operand.vmem [shape: bf16[8,8], index: 0, kind: input, shape index: {}]
  %s1 = inlined_call_operand.vmem [shape: bf16[8,128], index: 1, kind: input, shape index: {}]
  %s2 = inlined_call_operand.vmem [shape: f32[8,1], index: 2, kind: input, shape index: {}]
  %s3 = inlined_call_operand.vmem [shape: f32[1,128], index: 3, kind: input, shape index: {}]
  %s4 = inlined_call_operand.hbm [shape: f32[8,128], index: 4, kind: output, shape index: {}]
  %s5 = sld [smem:[#allocation0]]
  $region34: #{tpu_custom_call.1} parent=0
    _
  %s7 = ssub.s32 1, %s5
  %s8 = scalar_select 0, %s7, %s5
  $region1: #{tpu_custom_call.1} parent=0
    #allocation3 [shape = 'u8[4096]{0}', space=vmem, size = 0x1000, scoped, tag = 'output window, operand 0, single buffered']
    #allocation4 [shape = 's32[1]{0}', space=sflag, size = 0x4, scoped, tag = 'scoped memory for tpu_custom_call.1']
    %9 = vsyncpa [#allocation4], 0
    // Predicated region
    $region2: #{tpu_custom_call.1} parent=1 // pred_check
      _
    $region3: #{tpu_custom_call.1} parent=1 // pred_check_branch
      %11 = sbr.rel (0) target = $region5
    $region4: #{tpu_custom_call.1} parent=1 // pred_region
      _
    $region5: #{tpu_custom_call.1} parent=1 // pred_fallthru
      _
    // Predicated region
    $region6: #{tpu_custom_call.1} parent=1 // pred_check
      _
    $region7: #{tpu_custom_call.1} parent=1 // pred_check_branch
      %13 = sbr.rel (0) target = $region9
    $region8: #{tpu_custom_call.1} parent=1 // pred_region
      _
    $region9: #{tpu_custom_call.1} parent=1 // pred_fallthru
      _
    // Predicated region
    $region10: #{tpu_custom_call.1} parent=1 // pred_check
      _
    $region11: #{tpu_custom_call.1} parent=1 // pred_check_branch
      %15 = sbr.rel (0) target = $region13
    $region12: #{tpu_custom_call.1} parent=1 // pred_region
      _
    $region13: #{tpu_custom_call.1} parent=1 // pred_fallthru
      _
    // Predicated region
    $region14: #{tpu_custom_call.1} parent=1 // pred_check
      _
    $region15: #{tpu_custom_call.1} parent=1 // pred_check_branch
      %17 = sbr.rel (0) target = $region17
    $region16: #{tpu_custom_call.1} parent=1 // pred_region
      _
    $region17: #{tpu_custom_call.1} parent=1 // pred_fallthru
      _
    %p19 = scmp.eq.s32.totalorder 0, 0
    // Predicated region
    $region18: #{tpu_custom_call.1} parent=1 // pred_check
      %p20 = pneg %p19
    $region19: #{tpu_custom_call.1} parent=1 // pred_check_branch
      %22 = sbr.rel (%p20) target = $region21
    $region20: #{tpu_custom_call.1} parent=1 // pred_region
      %23 = vst [vmem:[#allocation2] sm:$0xff] 0.0
    $region21: #{tpu_custom_call.1} parent=1 // pred_fallthru
      _
    %v24 = vld [vmem:[#allocation2] sm:$0xff]
    %v25 = vld [vmem:[%s0] sm:$0xf]
    %v26 = vld [vmem:[%s1] sm:$0xf]
    %vm27 = vcmask 64512
    %v29 = vsel %vm27, %v25, 0
    %vm31 = vcmask 1043456
    %v33 = vsel %vm31, %v26, 0
    %35 = vmatpush.bf16.msra.mxu0 0
    %36 = vmatpush.bf16.msra.mxu0 0
    %37 = vmatpush.bf16.msra.mxu0 0
    %38 = vmatpush.bf16.msra.mxu0 0
    %39 = vmatpush.bf16.msra.mxu0 0
    %40 = vmatpush.bf16.msra.mxu0 0
    %41 = vmatpush.bf16.msra.mxu0 0
    %42 = vmatpush.bf16.msra.mxu0 %v33
    %43 = vmatmul.bf16.gmra.mxu0 %v29
    %v44 = vpop.f32.mrf.mxu0
    %v45 = vadd.f32 0.0, %v44
    %v46 = vpop.f32.mrf.mxu0
    %47 = vdwg.mxu0
    %v48 = vadd.f32 %v24, %v45
    %49 = vst [vmem:[#allocation2] sm:$0xff] %v48
    // Predicated region
    $region22: #{tpu_custom_call.1} parent=1 // pred_check
      %p50 = pneg %p19
    $region23: #{tpu_custom_call.1} parent=1 // pred_check_branch
      %52 = sbr.rel (%p50) target = $region25
    $region24: #{tpu_custom_call.1} parent=1 // pred_region
      %v53 = vld [vmem:[#allocation2] sm:$0xff]
      %v54 = vld [vmem:[%s2] sm:$0xff]
      %56 = vset.pattern.permute.xlu0 0
      %57 = vperm.xlu0 %56, %v54
      %v58 = vpop.permute.xlu0 %57
      %v60 = vmul.f32 %v53, %v58
      %v61 = vld [vmem:[%s3] sm:$0x1]
      %v63 = vperm.slane %v61, 0
      %v65 = vadd.f32 %v60, %v63
      %66 = vst [vmem:[#allocation3] sm:$0xff] %v65
    $region25: #{tpu_custom_call.1} parent=1 // pred_fallthru
      _
    // Predicated region
    $region26: #{tpu_custom_call.1} parent=1 // pred_check
      _
    $region27: #{tpu_custom_call.1} parent=1 // pred_check_branch
      %68 = sbr.rel (0) target = $region29
    $region28: #{tpu_custom_call.1} parent=1 // pred_region
      %70 = vsyncadd [#allocation4], 0
      %s72 = sshll.u32 [#allocation3], 4
      %s73 = int_to_ptr.vmem [resolvable:$true] %s72
      %s74 = sshll.u32 %s4, 4
      %s75 = int_to_ptr.hbm [resolvable:$true] %s74
      %77 = dma.vmem_to_hbm [thread:$0]  %s73, 128, %s75, [#allocation4]
    $region29: #{tpu_custom_call.1} parent=1 // pred_fallthru
      _
    // Predicated region
    $region30: #{tpu_custom_call.1} parent=1 // pred_check
      _
    $region31: #{tpu_custom_call.1} parent=1 // pred_check_branch
      %79 = sbr.rel (0) target = $region33
    $region32: #{tpu_custom_call.1} parent=1 // pred_region
      %81 = dma.done [#allocation4], 128
    $region33: #{tpu_custom_call.1} parent=1 // pred_fallthru
      _
    %82 = vsyncpa [#allocation4], 1

</llo_original>
